<compile_context>
chip_gen: v6e
topology: v6e:2x2x1
jax: 0.10.0
libtpu: 0.0.40
codegen_flags: <defaults>
</compile_context>

<pallas_src>
import functools

import jax
import jax.numpy as jnp
from jax.experimental import pallas as pl
from jax.experimental.pallas import tpu as pltpu


_VMEM_LIMIT = 48 * 1024 * 1024  # safe on v5e/v6e (128 MiB) and v7x (64 MiB) alike


def _choose_tile(dim, preferred, granule):
    """Largest tile <= `preferred` that is a multiple of `granule` and divides
    `dim`; falls back to the full dimension (always a legal TPU block shape)."""
    if dim <= preferred:
        return dim
    t = (preferred // granule) * granule
    while t >= granule:
        if dim % t == 0:
            return t
        t -= granule
    return dim


# ---------------------------------------------------------------------------
# Kernel 1: per-tensor min / max of the weight matrix.
# Elementwise (VPU) accumulation into a VMEM scratch across grid steps; the
# cross-lane/sublane reduce to (1, 1) and the masked (1,1) store happen exactly
# once, on the last grid step, so the per-step loop stays DMA-bound.
# ---------------------------------------------------------------------------
def _w_minmax_kernel(w_ref, min_ref, max_ref, pmin_ref, pmax_ref):
    i = pl.program_id(0)

    @pl.when(i == 0)
    def _():
        pmin_ref[...] = jnp.full_like(pmin_ref, jnp.inf)
        pmax_ref[...] = jnp.full_like(pmax_ref, -jnp.inf)

    tile = w_ref[...].astype(jnp.float32)      # widen in-tile (native dtype in HBM)
    pmin_ref[...] = jnp.minimum(pmin_ref[...], tile)
    pmax_ref[...] = jnp.maximum(pmax_ref[...], tile)

    @pl.when(i == pl.num_programs(0) - 1)
    def _():
        min_ref[...] = jnp.min(pmin_ref[...], keepdims=True)
        max_ref[...] = jnp.max(pmax_ref[...], keepdims=True)


# ---------------------------------------------------------------------------
# Kernel 2: fused quantize + matmul + dequantize.
#   per (i, j, k) tile:
#     Wq    = clamp(round(W_tile * (1/fc_scale)), -n, n-1)     (VPU, hides under MXU)
#     x_int = x_tile / prev_scale
#     acc  += x_int @ Wq.T                                      (MXU, f32 accumulate)
#   at the last k step:
#     b_int = clamp(round(b_tile * (1/bias_scale)), -nb, nb-1)
#     out   = (acc + b_int) * bias_scale
# Scalars arrive pre-inverted via SMEM (no per-iteration scalar divides).
# ---------------------------------------------------------------------------
def _quant_matmul_kernel(s_ref, x_ref, w_ref, b_ref, o_ref, acc_ref, *, n_w, n_b):
    k = pl.program_id(2)

    @pl.when(k == 0)
    def _():
        acc_ref[...] = jnp.zeros_like(acc_ref)

    inv_w_scale = s_ref[0]          # 1 / fc_scaling_factor
    prev_scale = s_ref[1]           # prev_act_scaling_factor

    w_q = jnp.clip(jnp.round(w_ref[...].astype(jnp.float32) * inv_w_scale),
                   -n_w, n_w - 1.0)
    x_int = x_ref[...].astype(jnp.float32) / prev_scale

    acc_ref[...] += jax.lax.dot_general(
        x_int, w_q, (((1,), (1,)), ((), ())),       # contract on K, W kept (N, K)
        preferred_element_type=jnp.float32)

    @pl.when(k == pl.num_programs(2) - 1)
    def _():
        inv_b_scale = s_ref[2]      # 1 / (fc_scale * prev_scale)
        out_scale = s_ref[3]        # fc_scale * prev_scale  (= bias_scaling_factor)
        b_q = jnp.clip(jnp.round(b_ref[...].astype(jnp.float32) * inv_b_scale),
                       -n_b, n_b - 1.0)
        o_ref[...] = ((acc_ref[...] + b_q) * out_scale).astype(o_ref.dtype)


def quant_linear_forward(x, weight, bias, prev_act_scaling_factor, *,
                         weight_bit=8, bias_bit=32):
    """QuantLinear.forward (quant_mode='symmetric', per_channel=False).

    Returns (output, bias_scaling_factor)."""
    N, K = weight.shape
    x2 = x.reshape(-1, K)                       # no dtype cast in the wrapper
    M = x2.shape[0]
    n_w = float(2 ** (weight_bit - 1) - 1)
    n_b = float(2 ** (bias_bit - 1) - 1)

    # ---- Pass 1: per-tensor weight min / max --------------------------------
    bytes_per_row = K * weight.dtype.itemsize
    target_rows = max(8, min(N, (2 * 1024 * 1024) // max(bytes_per_row, 1)))
    target_rows = max(8, (target_rows // 8) * 8)
    tr = _choose_tile(N, target_rows, 8)

    wmin, wmax = pl.pallas_call(
        _w_minmax_kernel,
        out_shape=(jax.ShapeDtypeStruct((1, 1), jnp.float32),
                   jax.ShapeDtypeStruct((1, 1), jnp.float32)),
        grid=(N // tr,),
        in_specs=[pl.BlockSpec((tr, K), lambda i: (i, 0))],
        out_specs=(pl.BlockSpec((1, 1), lambda i: (0, 0)),
                   pl.BlockSpec((1, 1), lambda i: (0, 0))),
        scratch_shapes=[pltpu.VMEM((tr, K), jnp.float32),
                        pltpu.VMEM((tr, K), jnp.float32)],
        compiler_params=pltpu.CompilerParams(
            dimension_semantics=("arbitrary",),
            vmem_limit_bytes=_VMEM_LIMIT),
    )(weight)

    # ---- Scalar glue: scaling factors (matches PyTorch reference math) ------
    w_sat = jnp.maximum(jnp.abs(wmin[0, 0]), jnp.abs(wmax[0, 0]))
    fc_scale = jnp.maximum(w_sat, 1e-8) / n_w            # symmetric_linear_quantization_params
    prev_scale = prev_act_scaling_factor.reshape(()).astype(jnp.float32)
    bias_scale = fc_scale * prev_scale
    smem_scalars = jnp.stack(
        [1.0 / fc_scale, prev_scale, 1.0 / bias_scale, bias_scale]
    ).astype(jnp.float32)

    # ---- Pass 2: fused quantize + matmul + dequantize ------------------------
    tm = _choose_tile(M, 512, 8)
    tn = _choose_tile(N, 512, 128)
    tk = _choose_tile(K, 512, 128)

    out2 = pl.pallas_call(
        functools.partial(_quant_matmul_kernel, n_w=n_w, n_b=n_b),
        out_shape=jax.ShapeDtypeStruct((M, N), x.dtype),
        grid=(M // tm, N // tn, K // tk),
        in_specs=[
            pl.BlockSpec(memory_space=pltpu.MemorySpace.SMEM),   # scales (4,)
            pl.BlockSpec((tm, tk), lambda i, j, k: (i, k)),      # x
            pl.BlockSpec((tn, tk), lambda i, j, k: (j, k)),      # weight
            pl.BlockSpec((1, tn), lambda i, j, k: (0, j)),       # bias
        ],
        out_specs=pl.BlockSpec((tm, tn), lambda i, j, k: (i, j)),
        scratch_shapes=[pltpu.VMEM((tm, tn), jnp.float32)],
        compiler_params=pltpu.CompilerParams(
            dimension_semantics=("parallel", "parallel", "arbitrary"),
            vmem_limit_bytes=_VMEM_LIMIT),
    )(smem_scalars, x2, weight, bias.reshape(1, N))

    out = out2.reshape(x.shape[:-1] + (N,))
    return out, bias_scale.reshape((1,))


def _reference(x, w, b, prev_act_scaling_factor, weight_bit=8, bias_bit=32):
    """Plain-JAX reference of QuantLinear.forward (symmetric, per-tensor)."""
    n = float(2 ** (weight_bit - 1) - 1)
    nb = float(2 ** (bias_bit - 1) - 1)
    x = x.astype(jnp.float32)
    w = w.astype(jnp.float32)
    b = b.astype(jnp.float32)
    w_min, w_max = jnp.min(w), jnp.max(w)
    fc_scale = jnp.maximum(jnp.maximum(jnp.abs(w_min), jnp.abs(w_max)), 1e-8) / n
    w_int = jnp.clip(jnp.round(1.0 / fc_scale * w), -n, n - 1.0)
    prev = prev_act_scaling_factor.reshape(()).astype(jnp.float32)
    bias_scale = fc_scale * prev
    b_int = jnp.clip(jnp.round(1.0 / bias_scale * b), -nb, nb - 1.0)
    x_int = x / prev
    out = (jnp.einsum("...k,nk->...n", x_int, w_int,
                      precision=jax.lax.Precision.HIGHEST) + b_int) * bias_scale
    return out, bias_scale.reshape((1,))


if __name__ == "__main__":
    key = jax.random.PRNGKey(0)
    kx, kw, kb = jax.random.split(key, 3)
    B, S, in_features, out_features = 2, 8, 32, 64

    x = jax.random.normal(kx, (B, S, in_features), dtype=jnp.float32)
    weight = 0.02 * jax.random.normal(kw, (out_features, in_features), dtype=jnp.float32)
    bias = 0.02 * jax.random.normal(kb, (out_features,), dtype=jnp.float32)
    # prev_act_scaling_factor as produced by an upstream 8-bit symmetric QuantAct.
    prev_scale = (jnp.max(jnp.abs(x)) / 127.0).reshape(1).astype(jnp.float32)

    out, bias_scale = quant_linear_forward(
        x, weight, bias, prev_scale, weight_bit=8, bias_bit=32)
    out = jax.block_until_ready(out)
    bias_scale = jax.block_until_ready(bias_scale)

    ref_out, ref_scale = _reference(x, weight, bias, prev_scale, 8, 32)
    assert out.shape == (B, S, out_features)
    assert jnp.allclose(bias_scale, ref_scale, atol=1e-10, rtol=1e-6), "scale mismatch"
    assert jnp.allclose(out, ref_out, atol=1e-3, rtol=1e-3), "output mismatch"

    print("KERNEL_OK")
</pallas_src>

<mosaic_0001>
module attributes {stable_mosaic.version = 11 : i64} {
  func.func @_w_minmax_kernel(%arg0: i32, %arg1: memref<64x32xf32, #tpu.memory_space<vmem>>, %arg2: memref<1x1xf32, #tpu.memory_space<vmem>>, %arg3: memref<1x1xf32, #tpu.memory_space<vmem>>, %arg4: memref<64x32xf32, #tpu.memory_space<vmem>>, %arg5: memref<64x32xf32, #tpu.memory_space<vmem>>) attributes {dimension_semantics = [#tpu.dimension_semantics<arbitrary>], iteration_bounds = array<i64: 1>, scalar_prefetch = 0 : i64, scratch_operands = 2 : i64, tpu.core_type = #tpu.core_type<tc>, window_params = [{transform_indices = @transform_0, window_bounds = array<i64: 64, 32>}, {pipeline_mode = #tpu.pipeline_mode<synchronous>, transform_indices = @transform_1, window_bounds = array<i64: 1, 1>}, {pipeline_mode = #tpu.pipeline_mode<synchronous>, transform_indices = @transform_2, window_bounds = array<i64: 1, 1>}]} {
    %c0_i32 = arith.constant 0 : i32
    %0 = arith.cmpi eq, %arg0, %c0_i32 : i32
    %1 = arith.extui %0 : i1 to i32
    %c0_i32_0 = arith.constant 0 : i32
    %2 = arith.cmpi ne, %1, %c0_i32_0 : i32
    scf.if %2 {
      %cst = arith.constant 0x7F800000 : f32
      %13 = vector.broadcast %cst : f32 to vector<64x32xf32>
      %c0_12 = arith.constant 0 : index
      %c0_13 = arith.constant 0 : index
      %14 = vector.load %arg4[%c0_12, %c0_13] : memref<64x32xf32, #tpu.memory_space<vmem>>, vector<64x32xf32>
      tpu.vector_store %arg4[%c0_12, %c0_13], %13 {strides = array<i32>} : memref<64x32xf32, #tpu.memory_space<vmem>>, vector<64x32xf32>,
      %cst_14 = arith.constant 0xFF800000 : f32
      %15 = vector.broadcast %cst_14 : f32 to vector<64x32xf32>
      %c0_15 = arith.constant 0 : index
      %c0_16 = arith.constant 0 : index
      %16 = vector.load %arg5[%c0_15, %c0_16] : memref<64x32xf32, #tpu.memory_space<vmem>>, vector<64x32xf32>
      tpu.vector_store %arg5[%c0_15, %c0_16], %15 {strides = array<i32>} : memref<64x32xf32, #tpu.memory_space<vmem>>, vector<64x32xf32>,
    } else {
    }
    %c0 = arith.constant 0 : index
    %c0_1 = arith.constant 0 : index
    %3 = vector.load %arg1[%c0, %c0_1] : memref<64x32xf32, #tpu.memory_space<vmem>>, vector<64x32xf32>
    %c0_2 = arith.constant 0 : index
    %c0_3 = arith.constant 0 : index
    %4 = vector.load %arg4[%c0_2, %c0_3] : memref<64x32xf32, #tpu.memory_space<vmem>>, vector<64x32xf32>
    %5 = arith.minimumf %4, %3 : vector<64x32xf32>
    %c0_4 = arith.constant 0 : index
    %c0_5 = arith.constant 0 : index
    %6 = vector.load %arg4[%c0_4, %c0_5] : memref<64x32xf32, #tpu.memory_space<vmem>>, vector<64x32xf32>
    tpu.vector_store %arg4[%c0_4, %c0_5], %5 {strides = array<i32>} : memref<64x32xf32, #tpu.memory_space<vmem>>, vector<64x32xf32>,
    %c0_6 = arith.constant 0 : index
    %c0_7 = arith.constant 0 : index
    %7 = vector.load %arg5[%c0_6, %c0_7] : memref<64x32xf32, #tpu.memory_space<vmem>>, vector<64x32xf32>
    %8 = arith.maximumf %7, %3 : vector<64x32xf32>
    %c0_8 = arith.constant 0 : index
    %c0_9 = arith.constant 0 : index
    %9 = vector.load %arg5[%c0_8, %c0_9] : memref<64x32xf32, #tpu.memory_space<vmem>>, vector<64x32xf32>
    tpu.vector_store %arg5[%c0_8, %c0_9], %8 {strides = array<i32>} : memref<64x32xf32, #tpu.memory_space<vmem>>, vector<64x32xf32>,
    %c0_i32_10 = arith.constant 0 : i32
    %10 = arith.cmpi eq, %arg0, %c0_i32_10 : i32
    %11 = arith.extui %10 : i1 to i32
    %c0_i32_11 = arith.constant 0 : i32
    %12 = arith.cmpi ne, %11, %c0_i32_11 : i32
    scf.if %12 {
      %c0_12 = arith.constant 0 : index
      %c0_13 = arith.constant 0 : index
      %13 = vector.load %arg4[%c0_12, %c0_13] : memref<64x32xf32, #tpu.memory_space<vmem>>, vector<64x32xf32>
      %14 = vector.shape_cast %13 : vector<64x32xf32> to vector<1x64x32xf32>
      %cst = arith.constant dense<0x7F800000> : vector<1xf32>
      %15 = vector.multi_reduction <minimumf>, %14, %cst [1, 2] : vector<1x64x32xf32> to vector<1xf32>
      %16 = vector.shape_cast %15 : vector<1xf32> to vector<1x1x1xf32>
      %17 = vector.extract %16[0, 0, 0] : f32 from vector<1x1x1xf32>
      %18 = vector.broadcast %17 : f32 to vector<1x1xf32>
      %c0_14 = arith.constant 0 : index
      %c0_15 = arith.constant 0 : index
      %19 = vector.load %arg2[%c0_14, %c0_15] : memref<1x1xf32, #tpu.memory_space<vmem>>, vector<1x1xf32>
      tpu.vector_store %arg2[%c0_14, %c0_15], %18 {strides = array<i32>} : memref<1x1xf32, #tpu.memory_space<vmem>>, vector<1x1xf32>,
      %c0_16 = arith.constant 0 : index
      %c0_17 = arith.constant 0 : index
      %20 = vector.load %arg5[%c0_16, %c0_17] : memref<64x32xf32, #tpu.memory_space<vmem>>, vector<64x32xf32>
      %21 = vector.shape_cast %20 : vector<64x32xf32> to vector<1x64x32xf32>
      %cst_18 = arith.constant dense<0xFF800000> : vector<1xf32>
      %22 = vector.multi_reduction <maximumf>, %21, %cst_18 [1, 2] : vector<1x64x32xf32> to vector<1xf32>
      %23 = vector.shape_cast %22 : vector<1xf32> to vector<1x1x1xf32>
      %24 = vector.extract %23[0, 0, 0] : f32 from vector<1x1x1xf32>
      %25 = vector.broadcast %24 : f32 to vector<1x1xf32>
      %c0_19 = arith.constant 0 : index
      %c0_20 = arith.constant 0 : index
      %26 = vector.load %arg3[%c0_19, %c0_20] : memref<1x1xf32, #tpu.memory_space<vmem>>, vector<1x1xf32>
      tpu.vector_store %arg3[%c0_19, %c0_20], %25 {strides = array<i32>} : memref<1x1xf32, #tpu.memory_space<vmem>>, vector<1x1xf32>,
    } else {
    }
    return
  }
  func.func @transform_0(%arg0: i32) -> (i32, i32) {
    %c0_i32 = arith.constant 0 : i32
    %c0_i32_0 = arith.constant 0 : i32
    return %arg0, %c0_i32 : i32, i32
  }
  func.func @transform_1(%arg0: i32) -> (i32, i32) {
    %c0_i32 = arith.constant 0 : i32
    %c0_i32_0 = arith.constant 0 : i32
    %c0_i32_1 = arith.constant 0 : i32
    return %c0_i32, %c0_i32_0 : i32, i32
  }
  func.func @transform_2(%arg0: i32) -> (i32, i32) {
    %c0_i32 = arith.constant 0 : i32
    %c0_i32_0 = arith.constant 0 : i32
    %c0_i32_1 = arith.constant 0 : i32
    return %c0_i32, %c0_i32_0 : i32, i32
  }
}

</mosaic_0001>

<llo_original>
// kernel: tpu_custom_call.1
$region0: #{tpu_custom_call.1}
  #allocation0 [shape = 'u32[]', space=smem, size = 0x4, offset = 0x4, fixed_abs, tag = 'smem constant byte address 0x4 - core index']
  #allocation1 [shape = 'u32[144,128]{1,0:T(1,128)}', space=vmem, size = 0x12000, scoped, tag = 'internal scratch']
  #allocation2 [shape = 'f32[64,32]{1,0:T(8,128)}', space=vmem, size = 0x8000, scoped, tag = 'scratch operand']
  #allocation3 [shape = 'f32[64,32]{1,0:T(8,128)}', space=vmem, size = 0x8000, scoped, tag = 'scratch operand']
  %s0 = inlined_call_operand.vmem [shape: f32[64,32], index: 0, kind: input, shape index: {}]
  %s1 = inlined_call_operand.hbm [shape: f32[1,1], index: 1, kind: output, shape index: {0}]
  %s2 = inlined_call_operand.hbm [shape: f32[1,1], index: 2, kind: output, shape index: {1}]
  %3 = xla_tuple %s1, %s2
  %s4 = sld [smem:[#allocation0]]
  $region30: #{tpu_custom_call.1} parent=0
    _
  %s6 = ssub.s32 1, %s4
  %s7 = scalar_select 0, %s6, %s4
  $region1: #{tpu_custom_call.1} parent=0
    #allocation4 [shape = 'u8[512]{0}', space=vmem, size = 0x400, scoped, tag = 'output window, operand 0, single buffered']
    #allocation5 [shape = 's32[1]{0}', space=sflag, size = 0x4, scoped, tag = 'scoped memory for tpu_custom_call.1']
    #allocation6 [shape = 'u8[512]{0}', space=vmem, size = 0x400, scoped, tag = 'output window, operand 1, single buffered']
    #allocation7 [shape = 's32[1]{0}', space=sflag, size = 0x4, scoped, tag = 'scoped memory for tpu_custom_call.1']
    %8 = vsyncpa [#allocation5], 0
    %9 = vsyncpa [#allocation7], 0
    // Predicated region
    $region2: #{tpu_custom_call.1} parent=1 // pred_check
      _
    $region3: #{tpu_custom_call.1} parent=1 // pred_check_branch
      %11 = sbr.rel (0) target = $region5
    $region4: #{tpu_custom_call.1} parent=1 // pred_region
      _
    $region5: #{tpu_custom_call.1} parent=1 // pred_fallthru
      _
    %p12 = scmp.eq.s32.totalorder 0, 0
    // Predicated region
    $region6: #{tpu_custom_call.1} parent=1 // pred_check
      %p13 = pneg %p12
    $region7: #{tpu_custom_call.1} parent=1 // pred_check_branch
      %15 = sbr.rel (%p13) target = $region9
    $region8: #{tpu_custom_call.1} parent=1 // pred_region
      %vm16 = vcmask 261120
      %17 = vst.msk [vmem:[#allocation2] sm:$0xff] %vm16, inf
      %18 = vst.msk [vmem:[#allocation2 + $0x8] sm:$0xff] %vm16, inf
      %19 = vst.msk [vmem:[#allocation2 + $0x10] sm:$0xff] %vm16, inf
      %20 = vst.msk [vmem:[#allocation2 + $0x18] sm:$0xff] %vm16, inf
      %21 = vst.msk [vmem:[#allocation2 + $0x20] sm:$0xff] %vm16, inf
      %22 = vst.msk [vmem:[#allocation2 + $0x28] sm:$0xff] %vm16, inf
      %23 = vst.msk [vmem:[#allocation2 + $0x30] sm:$0xff] %vm16, inf
      %24 = vst.msk [vmem:[#allocation2 + $0x38] sm:$0xff] %vm16, inf
      %25 = vst.msk [vmem:[#allocation3] sm:$0xff] %vm16, -inf
      %26 = vst.msk [vmem:[#allocation3 + $0x8] sm:$0xff] %vm16, -inf
      %27 = vst.msk [vmem:[#allocation3 + $0x10] sm:$0xff] %vm16, -inf
      %28 = vst.msk [vmem:[#allocation3 + $0x18] sm:$0xff] %vm16, -inf
      %29 = vst.msk [vmem:[#allocation3 + $0x20] sm:$0xff] %vm16, -inf
      %30 = vst.msk [vmem:[#allocation3 + $0x28] sm:$0xff] %vm16, -inf
      %31 = vst.msk [vmem:[#allocation3 + $0x30] sm:$0xff] %vm16, -inf
      %32 = vst.msk [vmem:[#allocation3 + $0x38] sm:$0xff] %vm16, -inf
    $region9: #{tpu_custom_call.1} parent=1 // pred_fallthru
      _
    %v33 = vld [vmem:[%s0] sm:$0xff]
    %v34 = vld [vmem:[%s0 + $0x8] sm:$0xff]
    %v35 = vld [vmem:[%s0 + $0x10] sm:$0xff]
    %v36 = vld [vmem:[%s0 + $0x18] sm:$0xff]
    %v37 = vld [vmem:[%s0 + $0x20] sm:$0xff]
    %v38 = vld [vmem:[%s0 + $0x28] sm:$0xff]
    %v39 = vld [vmem:[%s0 + $0x30] sm:$0xff]
    %v40 = vld [vmem:[%s0 + $0x38] sm:$0xff]
    %v41 = vld [vmem:[#allocation2] sm:$0xff]
    %v42 = vld [vmem:[#allocation2 + $0x8] sm:$0xff]
    %v43 = vld [vmem:[#allocation2 + $0x10] sm:$0xff]
    %v44 = vld [vmem:[#allocation2 + $0x18] sm:$0xff]
    %v45 = vld [vmem:[#allocation2 + $0x20] sm:$0xff]
    %v46 = vld [vmem:[#allocation2 + $0x28] sm:$0xff]
    %v47 = vld [vmem:[#allocation2 + $0x30] sm:$0xff]
    %v48 = vld [vmem:[#allocation2 + $0x38] sm:$0xff]
    %v49 = vmin.f32 %v41, %v33
    %v50 = vmin.f32 %v42, %v34
    %v51 = vmin.f32 %v43, %v35
    %v52 = vmin.f32 %v44, %v36
    %v53 = vmin.f32 %v45, %v37
    %v54 = vmin.f32 %v46, %v38
    %v55 = vmin.f32 %v47, %v39
    %v56 = vmin.f32 %v48, %v40
    %vm57 = vcmask 261120
    %58 = vst.msk [vmem:[#allocation2] sm:$0xff] %vm57, %v49
    %59 = vst.msk [vmem:[#allocation2 + $0x8] sm:$0xff] %vm57, %v50
    %60 = vst.msk [vmem:[#allocation2 + $0x10] sm:$0xff] %vm57, %v51
    %61 = vst.msk [vmem:[#allocation2 + $0x18] sm:$0xff] %vm57, %v52
    %62 = vst.msk [vmem:[#allocation2 + $0x20] sm:$0xff] %vm57, %v53
    %63 = vst.msk [vmem:[#allocation2 + $0x28] sm:$0xff] %vm57, %v54
    %64 = vst.msk [vmem:[#allocation2 + $0x30] sm:$0xff] %vm57, %v55
    %65 = vst.msk [vmem:[#allocation2 + $0x38] sm:$0xff] %vm57, %v56
    %v66 = vld [vmem:[#allocation3] sm:$0xff]
    %v67 = vld [vmem:[#allocation3 + $0x8] sm:$0xff]
    %v68 = vld [vmem:[#allocation3 + $0x10] sm:$0xff]
    %v69 = vld [vmem:[#allocation3 + $0x18] sm:$0xff]
    %v70 = vld [vmem:[#allocation3 + $0x20] sm:$0xff]
    %v71 = vld [vmem:[#allocation3 + $0x28] sm:$0xff]
    %v72 = vld [vmem:[#allocation3 + $0x30] sm:$0xff]
    %v73 = vld [vmem:[#allocation3 + $0x38] sm:$0xff]
    %v74 = vmax.f32 %v66, %v33
    %v75 = vmax.f32 %v67, %v34
    %v76 = vmax.f32 %v68, %v35
    %v77 = vmax.f32 %v69, %v36
    %v78 = vmax.f32 %v70, %v37
    %v79 = vmax.f32 %v71, %v38
    %v80 = vmax.f32 %v72, %v39
    %v81 = vmax.f32 %v73, %v40
    %82 = vst.msk [vmem:[#allocation3] sm:$0xff] %vm57, %v74
    %83 = vst.msk [vmem:[#allocation3 + $0x8] sm:$0xff] %vm57, %v75
    %84 = vst.msk [vmem:[#allocation3 + $0x10] sm:$0xff] %vm57, %v76
    %85 = vst.msk [vmem:[#allocation3 + $0x18] sm:$0xff] %vm57, %v77
    %86 = vst.msk [vmem:[#allocation3 + $0x20] sm:$0xff] %vm57, %v78
    %87 = vst.msk [vmem:[#allocation3 + $0x28] sm:$0xff] %vm57, %v79
    %88 = vst.msk [vmem:[#allocation3 + $0x30] sm:$0xff] %vm57, %v80
    %89 = vst.msk [vmem:[#allocation3 + $0x38] sm:$0xff] %vm57, %v81
    // Predicated region
    $region10: #{tpu_custom_call.1} parent=1 // pred_check
      %p90 = pneg %p12
    $region11: #{tpu_custom_call.1} parent=1 // pred_check_branch
      %92 = sbr.rel (%p90) target = $region13
    $region12: #{tpu_custom_call.1} parent=1 // pred_region
      %v93 = vld [vmem:[#allocation2] sm:$0xff]
      %v94 = vld [vmem:[#allocation2 + $0x8] sm:$0xff]
      %v95 = vld [vmem:[#allocation2 + $0x10] sm:$0xff]
      %v96 = vld [vmem:[#allocation2 + $0x18] sm:$0xff]
      %v97 = vld [vmem:[#allocation2 + $0x20] sm:$0xff]
      %v98 = vld [vmem:[#allocation2 + $0x28] sm:$0xff]
      %v99 = vld [vmem:[#allocation2 + $0x30] sm:$0xff]
      %v100 = vld [vmem:[#allocation2 + $0x38] sm:$0xff]
      %v101 = vsel %vm57, %v93, inf
      %v102 = vsel %vm57, %v94, inf
      %v103 = vsel %vm57, %v95, inf
      %v104 = vsel %vm57, %v96, inf
      %v105 = vsel %vm57, %v97, inf
      %v106 = vmin.f32 %v101, %v105
      %v107 = vsel %vm57, %v98, inf
      %v108 = vmin.f32 %v102, %v107
      %v109 = vsel %vm57, %v99, inf
      %v110 = vmin.f32 %v103, %v109
      %v111 = vsel %vm57, %v100, inf
      %v112 = vmin.f32 %v104, %v111
      %v113 = vmin.f32 %v106, %v108
      %v114 = vmin.f32 %v110, %v112
      %v115 = vmin.f32 %v113, %v114
      %116 = vmin.xlane.f32.xlu0 %v115
      %v117 = vpop.xlane.xlu0 %116
      %v118 = vrot.slane %v117, 4
      %v119 = vmin.f32 %v117, %v118
      %v120 = vrot.slane %v119, 2
      %v121 = vmin.f32 %v119, %v120
      %v122 = vrot.slane %v121, 1
      %v123 = vmin.f32 %v121, %v122
      %s124 = vtos %v123
      %v125 = vstv %s124
      %vm126 = vcmask 0
      %127 = vst.msk [vmem:[#allocation4] sm:$0x1] %vm126, %v125
      %v128 = vld [vmem:[#allocation3] sm:$0xff]
      %v129 = vld [vmem:[#allocation3 + $0x8] sm:$0xff]
      %v130 = vld [vmem:[#allocation3 + $0x10] sm:$0xff]
      %v131 = vld [vmem:[#allocation3 + $0x18] sm:$0xff]
      %v132 = vld [vmem:[#allocation3 + $0x20] sm:$0xff]
      %v133 = vld [vmem:[#allocation3 + $0x28] sm:$0xff]
      %v134 = vld [vmem:[#allocation3 + $0x30] sm:$0xff]
      %v135 = vld [vmem:[#allocation3 + $0x38] sm:$0xff]
      %v136 = vsel %vm57, %v128, -inf
      %v137 = vsel %vm57, %v129, -inf
      %v138 = vsel %vm57, %v130, -inf
      %v139 = vsel %vm57, %v131, -inf
      %v140 = vsel %vm57, %v132, -inf
      %v141 = vmax.f32 %v136, %v140
      %v142 = vsel %vm57, %v133, -inf
      %v143 = vmax.f32 %v137, %v142
      %v144 = vsel %vm57, %v134, -inf
      %v145 = vmax.f32 %v138, %v144
      %v146 = vsel %vm57, %v135, -inf
      %v147 = vmax.f32 %v139, %v146
      %v148 = vmax.f32 %v141, %v143
      %v149 = vmax.f32 %v145, %v147
      %v150 = vmax.f32 %v148, %v149
      %151 = vmax.xlane.f32.xlu0 %v150
      %v152 = vpop.xlane.xlu0 %151
      %v153 = vrot.slane %v152, 4
      %v154 = vmax.f32 %v152, %v153
      %v155 = vrot.slane %v154, 2
      %v156 = vmax.f32 %v154, %v155
      %v157 = vrot.slane %v156, 1
      %v158 = vmax.f32 %v156, %v157
      %s159 = vtos %v158
      %v160 = vstv %s159
      %161 = vst.msk [vmem:[#allocation6] sm:$0x1] %vm126, %v160
    $region13: #{tpu_custom_call.1} parent=1 // pred_fallthru
      _
    // Predicated region
    $region14: #{tpu_custom_call.1} parent=1 // pred_check
      _
    $region15: #{tpu_custom_call.1} parent=1 // pred_check_branch
      %163 = sbr.rel (0) target = $region17
    $region16: #{tpu_custom_call.1} parent=1 // pred_region
      %s165 = ssub.s32 16, 16
      %166 = vsyncadd [#allocation5], %s165
      %s168 = sshll.u32 [#allocation4], 4
      %s169 = int_to_ptr.vmem [resolvable:$true] %s168
      %171 = dma.vmem_to_hbm [thread:$0]  %s169, 16, %s1, [#allocation5]
    $region17: #{tpu_custom_call.1} parent=1 // pred_fallthru
      _
    // Predicated region
    $region18: #{tpu_custom_call.1} parent=1 // pred_check
      _
    $region19: #{tpu_custom_call.1} parent=1 // pred_check_branch
      %173 = sbr.rel (0) target = $region21
    $region20: #{tpu_custom_call.1} parent=1 // pred_region
      %s175 = ssub.s32 16, 16
      %176 = vsyncadd [#allocation7], %s175
      %s178 = sshll.u32 [#allocation6], 4
      %s179 = int_to_ptr.vmem [resolvable:$true] %s178
      %181 = dma.vmem_to_hbm [thread:$0]  %s179, 16, %s2, [#allocation7]
    $region21: #{tpu_custom_call.1} parent=1 // pred_fallthru
      _
    // Predicated region
    $region22: #{tpu_custom_call.1} parent=1 // pred_check
      _
    $region23: #{tpu_custom_call.1} parent=1 // pred_check_branch
      %183 = sbr.rel (0) target = $region25
    $region24: #{tpu_custom_call.1} parent=1 // pred_region
      %184 = dma.done [#allocation5], 16
    $region25: #{tpu_custom_call.1} parent=1 // pred_fallthru
      _
    // Predicated region
    $region26: #{tpu_custom_call.1} parent=1 // pred_check
      _
    $region27: #{tpu_custom_call.1} parent=1 // pred_check_branch
      %186 = sbr.rel (0) target = $region29
    $region28: #{tpu_custom_call.1} parent=1 // pred_region
      %187 = dma.done [#allocation7], 16
    $region29: #{tpu_custom_call.1} parent=1 // pred_fallthru
      _
    %188 = vsyncpa [#allocation5], 1
    %189 = vsyncpa [#allocation7], 1

</llo_original>
